<compile_context>
chip_gen: v5e
topology: v5e:2x2
jax: 0.10.0
libtpu: 0.0.40
codegen_flags: <defaults>
</compile_context>

<pallas_src>
import functools

import jax
import jax.numpy as jnp
import numpy as np
from jax.experimental import pallas as pl
from jax.experimental.pallas import tpu as pltpu


def temporal_block_kernel(x_ref, w1_ref, b1_ref, w2_ref, b2_ref,
                          wse1_ref, bse1_ref, wse2_ref, bse2_ref,
                          wds_ref, bds_ref, o_ref,
                          *, K, dilation, pad, L):
    f32 = jnp.float32
    cdt = w1_ref.dtype                      # MXU operand dtype (bf16 or f32)

    Bb = o_ref.shape[0]
    Cout = o_ref.shape[1]
    Lp = o_ref.shape[2]                     # lane-dense (multiple of 128) length
    Cin = x_ref.shape[1]                    # already padded to a multiple of 8

    w1 = w1_ref[...]                        # (Cout, K*Cin)   fused conv1 weight
    w2 = w2_ref[...]                        # (Cout, K*Cout)  fused conv2 weight
    wds = wds_ref[...]                      # (Cout, Cin)     1x1 downsample
    b1 = b1_ref[...].astype(f32)            # (Cout, 1)
    b2 = b2_ref[...].astype(f32)
    bds = bds_ref[...].astype(f32)

    x = x_ref[...].astype(f32)              # (Bb, Cin, L)

    # Mask of valid time positions: SE average pool is over L, not Lp.
    t_idx = jax.lax.broadcasted_iota(jnp.int32, (Cout, Lp), 1)
    valid = (t_idx < L).astype(f32)
    inv_L = 1.0 / L

    h2_all, res_all, s_cols = [], [], []
    for b in range(Bb):                     # static unroll; Bb is small
        # Causal left pad + right pad to Lp, all in registers (no HBM/VMEM copy).
        pieces = []
        if pad > 0:
            pieces.append(jnp.zeros((Cin, pad), f32))
        pieces.append(x[b])
        if Lp > L:
            pieces.append(jnp.zeros((Cin, Lp - L), f32))
        xfull = pieces[0] if len(pieces) == 1 else jnp.concatenate(pieces, -1)
        # xfull: (Cin, pad + Lp)

        # ---- conv1: all K taps fused into a single MXU matmul --------------
        stk1 = jnp.concatenate(
            [xfull[:, k * dilation:k * dilation + Lp] for k in range(K)],
            axis=0)                                           # (K*Cin, Lp)
        h1 = jnp.maximum(
            jnp.dot(w1, stk1.astype(cdt), preferred_element_type=f32) + b1,
            0.0)                                              # (Cout, Lp) f32
        # dropout1: eval mode -> identity

        # ---- conv2: causally padded h1 kept in registers --------------------
        if pad > 0:
            h1full = jnp.concatenate([jnp.zeros((Cout, pad), f32), h1], -1)
        else:
            h1full = h1                                       # (Cout, pad + Lp)
        stk2 = jnp.concatenate(
            [h1full[:, k * dilation:k * dilation + Lp] for k in range(K)],
            axis=0)                                           # (K*Cout, Lp)
        h2 = jnp.maximum(
            jnp.dot(w2, stk2.astype(cdt), preferred_element_type=f32) + b2,
            0.0)                                              # (Cout, Lp) f32
        # dropout2: eval mode -> identity
        # TODO(synk): ScConv is not defined in the reference source; identity.

        # ---- residual 1x1 conv (reuses the same in-register padded input) --
        res = jnp.dot(wds, xfull[:, pad:pad + Lp].astype(cdt),
                      preferred_element_type=f32) + bds       # (Cout, Lp)

        # ---- SE average pool over the valid L positions ---------------------
        s_cols.append(jnp.sum(h2 * valid, axis=1, keepdims=True) * inv_L)
        h2_all.append(h2)
        res_all.append(res)

    # ---- SE FC layers, batched across Bb (RHS width Bb, not 1) --------------
    S = jnp.concatenate(s_cols, axis=1) if Bb > 1 else s_cols[0]   # (Cout, Bb)
    z1 = jnp.maximum(
        jnp.dot(wse1_ref[...].astype(f32), S, preferred_element_type=f32)
        + bse1_ref[...].astype(f32), 0.0)                          # (Cr, Bb)
    gate = jax.nn.sigmoid(
        jnp.dot(wse2_ref[...].astype(f32), z1, preferred_element_type=f32)
        + bse2_ref[...].astype(f32))                               # (Cout, Bb)

    # ---- gate, residual add, final relu, lane-dense stores -------------------
    for b in range(Bb):
        out_b = jnp.maximum(h2_all[b] * gate[:, b:b + 1] + res_all[b], 0.0)
        o_ref[b] = out_b.astype(o_ref.dtype)


def _pick_block_b(B, max_bb=8):
    for bb in range(min(B, max_bb), 0, -1):
        if B % bb == 0:
            return bb
    return 1


def temporal_block(x, params, *, kernel_size, dilation, padding,
                   compute_dtype=jnp.bfloat16, block_b=None):
    """Pallas TemporalBlock forward. params are in PyTorch-module layout."""
    B, Cin, L = x.shape
    w1, b1, w2, b2, wse1, bse1, wse2, bse2, wds, bds = params
    Cout = w1.shape[0]
    K = kernel_size

    # Pad Cin to a multiple of 8 so in-kernel sublane stacking is tile-aligned.
    Cin_p = ((Cin + 7) // 8) * 8
    if Cin_p != Cin:
        x_in = jnp.pad(x, ((0, 0), (0, Cin_p - Cin), (0, 0)))
        w1p = jnp.pad(w1, ((0, 0), (0, Cin_p - Cin), (0, 0)))
        wdsp = jnp.pad(wds, ((0, 0), (0, Cin_p - Cin)))
    else:
        x_in, w1p, wdsp = x, w1, wds

    # Fused, lane-dense conv weights: w1f[o, k*Cin + c] = w1[o, c, k].
    w1f = jnp.transpose(w1p, (0, 2, 1)).reshape(Cout, K * Cin_p).astype(compute_dtype)
    w2f = jnp.transpose(w2, (0, 2, 1)).reshape(Cout, K * Cout).astype(compute_dtype)
    wdsf = wdsp.astype(compute_dtype)

    Lp = max(128, ((L + 127) // 128) * 128)        # lane-dense output length
    if block_b is None:
        block_b = _pick_block_b(B)
    assert B % block_b == 0
    grid = (B // block_b,)

    kern = functools.partial(temporal_block_kernel, K=K, dilation=dilation,
                             pad=padding, L=L)

    def full(a):
        nd = a.ndim
        return pl.BlockSpec(a.shape, lambda i, nd=nd: (0,) * nd)

    grid_spec = pltpu.PrefetchScalarGridSpec(
        num_scalar_prefetch=0,
        grid=grid,
        in_specs=[
            pl.BlockSpec((block_b, Cin_p, L), lambda i: (i, 0, 0)),  # x
            full(w1f), full(b1),          # fused conv1
            full(w2f), full(b2),          # fused conv2
            full(wse1), full(bse1),       # SE fc1
            full(wse2), full(bse2),       # SE fc2
            full(wdsf), full(bds),        # 1x1 downsample
        ],
        out_specs=pl.BlockSpec((block_b, Cout, Lp), lambda i: (i, 0, 0)),
    )

    out = pl.pallas_call(
        kern,
        out_shape=jax.ShapeDtypeStruct((B, Cout, Lp), x.dtype),
        grid_spec=grid_spec,
        compiler_params=pltpu.CompilerParams(dimension_semantics=("parallel",)),
    )(x_in, w1f, b1, w2f, b2, wse1, bse1, wse2, bse2, wdsf, bds)
    return out[:, :, :L]


def init_params(key, Cin, Cout, K, reduction=16):
    """Deterministic synthetic parameters in PyTorch-module layout."""
    ks = jax.random.split(key, 12)
    Cr = max(Cout // reduction, 1)

    def wnorm(v, g):
        # PyTorch weight_norm (dim=0): per-out-channel norm over (in, k).
        n = jnp.sqrt(jnp.sum(v ** 2, axis=(1, 2), keepdims=True))
        return g[:, None, None] * v / n

    v1 = 0.01 * jax.random.normal(ks[0], (Cout, Cin, K), jnp.float32)
    g1 = 1.0 + 0.1 * jax.random.normal(ks[1], (Cout,), jnp.float32)
    w1 = wnorm(v1, g1)
    b1 = 0.1 * jax.random.normal(ks[2], (Cout, 1), jnp.float32)

    v2 = 0.01 * jax.random.normal(ks[3], (Cout, Cout, K), jnp.float32)
    g2 = 1.0 + 0.1 * jax.random.normal(ks[4], (Cout,), jnp.float32)
    w2 = wnorm(v2, g2)
    b2 = 0.1 * jax.random.normal(ks[5], (Cout, 1), jnp.float32)

    wse1 = 0.3 * jax.random.normal(ks[6], (Cr, Cout), jnp.float32)
    bse1 = 0.1 * jax.random.normal(ks[7], (Cr, 1), jnp.float32)
    wse2 = 0.3 * jax.random.normal(ks[8], (Cout, Cr), jnp.float32)
    bse2 = 0.1 * jax.random.normal(ks[9], (Cout, 1), jnp.float32)

    wds = 0.01 * jax.random.normal(ks[10], (Cout, Cin), jnp.float32)
    bds = 0.1 * jax.random.normal(ks[11], (Cout, 1), jnp.float32)
    return (w1, b1, w2, b2, wse1, bse1, wse2, bse2, wds, bds)


def reference(x, params, *, kernel_size, dilation, padding):
    """Pure-JAX f32 reference of the same forward pass (module-faithful)."""
    w1, b1, w2, b2, wse1, bse1, wse2, bse2, wds, bds = params

    def causal_conv(inp, w, b):
        L = inp.shape[-1]
        p = jnp.pad(inp, ((0, 0), (0, 0), (padding, 0)))
        acc = sum(jnp.einsum('oc,bcl->bol', w[:, :, k],
                             p[:, :, k * dilation:k * dilation + L])
                  for k in range(kernel_size))
        return acc + b[None]

    h1 = jax.nn.relu(causal_conv(x, w1, b1))
    h2 = jax.nn.relu(causal_conv(h1, w2, b2))
    s = jnp.mean(h2, axis=2)                               # (B, Cout)
    z1 = jax.nn.relu(s @ wse1.T + bse1[:, 0])
    gate = jax.nn.sigmoid(z1 @ wse2.T + bse2[:, 0])
    se = h2 * gate[:, :, None]
    res = jnp.einsum('oc,bcl->bol', wds, x) + bds[None]
    return jax.nn.relu(se + res)


if __name__ == "__main__":
    # Shapes consistent with TemporalBlock(n_inputs=4, n_outputs=32,
    # kernel_size=3, stride=1, dilation=1, padding=(k-1)*dilation).
    B, Cin, Cout, L = 2, 4, 32, 16
    K, dilation = 3, 1
    padding = (K - 1) * dilation

    key = jax.random.PRNGKey(0)
    kx, kp = jax.random.split(key)
    x = jax.random.normal(kx, (B, Cin, L), jnp.float32)
    params = init_params(kp, Cin, Cout, K)

    ref = reference(x, params, kernel_size=K, dilation=dilation, padding=padding)

    # 1) Exact-semantics check: f32 MXU operands, tight tolerance.
    out_f32 = jax.block_until_ready(
        temporal_block(x, params, kernel_size=K, dilation=dilation,
                       padding=padding, compute_dtype=jnp.float32))
    assert out_f32.shape == (B, Cout, L)
    np.testing.assert_allclose(np.asarray(out_f32), np.asarray(ref),
                               rtol=1e-4, atol=1e-4)

    # 2) Fast path: bf16 MXU operands with f32 accumulation (looser tolerance).
    out_bf16 = jax.block_until_ready(
        temporal_block(x, params, kernel_size=K, dilation=dilation,
                       padding=padding, compute_dtype=jnp.bfloat16))
    assert out_bf16.shape == (B, Cout, L)
    np.testing.assert_allclose(np.asarray(out_bf16), np.asarray(ref),
                               rtol=5e-2, atol=5e-2)

    print("KERNEL_OK")
</pallas_src>

<mosaic_0001>
module attributes {stable_mosaic.version = 11 : i64} {
  func.func @temporal_block_kernel(%arg0: i32, %arg1: memref<2x8x16xf32, #tpu.memory_space<vmem>>, %arg2: memref<32x24xf32, #tpu.memory_space<vmem>>, %arg3: memref<32x1xf32, #tpu.memory_space<vmem>>, %arg4: memref<32x96xf32, #tpu.memory_space<vmem>>, %arg5: memref<32x1xf32, #tpu.memory_space<vmem>>, %arg6: memref<2x32xf32, #tpu.memory_space<vmem>>, %arg7: memref<2x1xf32, #tpu.memory_space<vmem>>, %arg8: memref<32x2xf32, #tpu.memory_space<vmem>>, %arg9: memref<32x1xf32, #tpu.memory_space<vmem>>, %arg10: memref<32x8xf32, #tpu.memory_space<vmem>>, %arg11: memref<32x1xf32, #tpu.memory_space<vmem>>, %arg12: memref<2x32x128xf32, #tpu.memory_space<vmem>>) attributes {dimension_semantics = [#tpu.dimension_semantics<parallel>], iteration_bounds = array<i64: 1>, scalar_prefetch = 0 : i64, scratch_operands = 0 : i64, tpu.core_type = #tpu.core_type<tc>, window_params = [{transform_indices = @transform_0, window_bounds = array<i64: 2, 8, 16>}, {pipeline_mode = #tpu.pipeline_mode<synchronous>, transform_indices = @transform_1, window_bounds = array<i64: 32, 24>}, {pipeline_mode = #tpu.pipeline_mode<synchronous>, transform_indices = @transform_2, window_bounds = array<i64: 32, 1>}, {pipeline_mode = #tpu.pipeline_mode<synchronous>, transform_indices = @transform_3, window_bounds = array<i64: 32, 96>}, {pipeline_mode = #tpu.pipeline_mode<synchronous>, transform_indices = @transform_4, window_bounds = array<i64: 32, 1>}, {pipeline_mode = #tpu.pipeline_mode<synchronous>, transform_indices = @transform_5, window_bounds = array<i64: 2, 32>}, {pipeline_mode = #tpu.pipeline_mode<synchronous>, transform_indices = @transform_6, window_bounds = array<i64: 2, 1>}, {pipeline_mode = #tpu.pipeline_mode<synchronous>, transform_indices = @transform_7, window_bounds = array<i64: 32, 2>}, {pipeline_mode = #tpu.pipeline_mode<synchronous>, transform_indices = @transform_8, window_bounds = array<i64: 32, 1>}, {pipeline_mode = #tpu.pipeline_mode<synchronous>, transform_indices = @transform_9, window_bounds = array<i64: 32, 8>}, {pipeline_mode = #tpu.pipeline_mode<synchronous>, transform_indices = @transform_10, window_bounds = array<i64: 32, 1>}, {transform_indices = @transform_11, window_bounds = array<i64: 2, 32, 128>}]} {
    %c0 = arith.constant 0 : index
    %c0_0 = arith.constant 0 : index
    %0 = vector.load %arg2[%c0, %c0_0] : memref<32x24xf32, #tpu.memory_space<vmem>>, vector<32x24xf32>
    %c0_1 = arith.constant 0 : index
    %c0_2 = arith.constant 0 : index
    %1 = vector.load %arg4[%c0_1, %c0_2] : memref<32x96xf32, #tpu.memory_space<vmem>>, vector<32x96xf32>
    %c0_3 = arith.constant 0 : index
    %c0_4 = arith.constant 0 : index
    %2 = vector.load %arg10[%c0_3, %c0_4] : memref<32x8xf32, #tpu.memory_space<vmem>>, vector<32x8xf32>
    %c0_5 = arith.constant 0 : index
    %c0_6 = arith.constant 0 : index
    %3 = vector.load %arg3[%c0_5, %c0_6] : memref<32x1xf32, #tpu.memory_space<vmem>>, vector<32x1xf32>
    %c0_7 = arith.constant 0 : index
    %c0_8 = arith.constant 0 : index
    %4 = vector.load %arg5[%c0_7, %c0_8] : memref<32x1xf32, #tpu.memory_space<vmem>>, vector<32x1xf32>
    %c0_9 = arith.constant 0 : index
    %c0_10 = arith.constant 0 : index
    %5 = vector.load %arg11[%c0_9, %c0_10] : memref<32x1xf32, #tpu.memory_space<vmem>>, vector<32x1xf32>
    %c0_11 = arith.constant 0 : index
    %c0_12 = arith.constant 0 : index
    %c0_13 = arith.constant 0 : index
    %6 = vector.load %arg1[%c0_11, %c0_12, %c0_13] : memref<2x8x16xf32, #tpu.memory_space<vmem>>, vector<2x8x16xf32>
    %7 = tpu.iota {dimensions = array<i32: 1>} : vector<32x128xi32>
    %c16_i32 = arith.constant 16 : i32
    %8 = vector.broadcast %c16_i32 : i32 to vector<32x128xi32>
    %9 = arith.cmpi slt, %7, %8 : vector<32x128xi32>
    %10 = arith.extui %9 : vector<32x128xi1> to vector<32x128xi32>
    %11 = arith.sitofp %10 : vector<32x128xi32> to vector<32x128xf32>
    %cst = arith.constant 0.000000e+00 : f32
    %12 = vector.broadcast %cst : f32 to vector<8x2xf32>
    %13 = vector.extract_strided_slice %6 {offsets = [0, 0, 0], sizes = [1, 8, 16], strides = [1, 1, 1]} : vector<2x8x16xf32> to vector<1x8x16xf32>
    %14 = vector.shape_cast %13 : vector<1x8x16xf32> to vector<8x16xf32>
    %cst_14 = arith.constant 0.000000e+00 : f32
    %15 = vector.broadcast %cst_14 : f32 to vector<8x112xf32>
    %16 = tpu.concatenate %12, %14, %15 in 1 : vector<8x2xf32>, vector<8x16xf32>, vector<8x112xf32> -> vector<8x130xf32>
    %17 = vector.extract_strided_slice %16 {offsets = [0, 0], sizes = [8, 128], strides = [1, 1]} : vector<8x130xf32> to vector<8x128xf32>
    %18 = vector.extract_strided_slice %16 {offsets = [0, 1], sizes = [8, 128], strides = [1, 1]} : vector<8x130xf32> to vector<8x128xf32>
    %19 = vector.extract_strided_slice %16 {offsets = [0, 2], sizes = [8, 128], strides = [1, 1]} : vector<8x130xf32> to vector<8x128xf32>
    %20 = tpu.concatenate %17, %18, %19 in 0 : vector<8x128xf32>, vector<8x128xf32>, vector<8x128xf32> -> vector<24x128xf32>
    %cst_15 = arith.constant dense<0.000000e+00> : vector<32x128xf32>
    %21 = tpu.matmul %0, %20, %cst_15 {dimension_numbers = #tpu.dot_dimension_numbers<[1], [0], [0], [1], [0, 0, 1, 1], [], []>} : vector<32x24xf32>, vector<24x128xf32>, vector<32x128xf32> -> vector<32x128xf32>
    %22 = vector.broadcast %3 : vector<32x1xf32> to vector<32x128xf32>
    %23 = arith.addf %21, %22 : vector<32x128xf32>
    %cst_16 = arith.constant 0.000000e+00 : f32
    %24 = vector.broadcast %cst_16 : f32 to vector<32x128xf32>
    %25 = arith.maximumf %23, %24 : vector<32x128xf32>
    %cst_17 = arith.constant 0.000000e+00 : f32
    %26 = vector.broadcast %cst_17 : f32 to vector<32x2xf32>
    %27 = tpu.concatenate %26, %25 in 1 : vector<32x2xf32>, vector<32x128xf32> -> vector<32x130xf32>
    %28 = vector.extract_strided_slice %27 {offsets = [0, 0], sizes = [32, 128], strides = [1, 1]} : vector<32x130xf32> to vector<32x128xf32>
    %29 = vector.extract_strided_slice %27 {offsets = [0, 1], sizes = [32, 128], strides = [1, 1]} : vector<32x130xf32> to vector<32x128xf32>
    %30 = vector.extract_strided_slice %27 {offsets = [0, 2], sizes = [32, 128], strides = [1, 1]} : vector<32x130xf32> to vector<32x128xf32>
    %31 = tpu.concatenate %28, %29, %30 in 0 : vector<32x128xf32>, vector<32x128xf32>, vector<32x128xf32> -> vector<96x128xf32>
    %cst_18 = arith.constant dense<0.000000e+00> : vector<32x128xf32>
    %32 = tpu.matmul %1, %31, %cst_18 {dimension_numbers = #tpu.dot_dimension_numbers<[1], [0], [0], [1], [0, 0, 1, 1], [], []>} : vector<32x96xf32>, vector<96x128xf32>, vector<32x128xf32> -> vector<32x128xf32>
    %33 = vector.broadcast %4 : vector<32x1xf32> to vector<32x128xf32>
    %34 = arith.addf %32, %33 : vector<32x128xf32>
    %cst_19 = arith.constant 0.000000e+00 : f32
    %35 = vector.broadcast %cst_19 : f32 to vector<32x128xf32>
    %36 = arith.maximumf %34, %35 : vector<32x128xf32>
    %37 = vector.extract_strided_slice %16 {offsets = [0, 2], sizes = [8, 128], strides = [1, 1]} : vector<8x130xf32> to vector<8x128xf32>
    %cst_20 = arith.constant dense<0.000000e+00> : vector<32x128xf32>
    %38 = tpu.matmul %2, %37, %cst_20 {dimension_numbers = #tpu.dot_dimension_numbers<[1], [0], [0], [1], [0, 0, 1, 1], [], []>} : vector<32x8xf32>, vector<8x128xf32>, vector<32x128xf32> -> vector<32x128xf32>
    %39 = vector.broadcast %5 : vector<32x1xf32> to vector<32x128xf32>
    %40 = arith.addf %38, %39 : vector<32x128xf32>
    %41 = arith.mulf %36, %11 : vector<32x128xf32>
    %cst_21 = arith.constant dense<0.000000e+00> : vector<32xf32>
    %42 = vector.multi_reduction <add>, %41, %cst_21 [1] : vector<32x128xf32> to vector<32xf32>
    %43 = vector.shape_cast %42 : vector<32xf32> to vector<32x1xf32>
    %cst_22 = arith.constant 6.250000e-02 : f32
    %44 = vector.broadcast %cst_22 : f32 to vector<32x1xf32>
    %45 = arith.mulf %43, %44 : vector<32x1xf32>
    %cst_23 = arith.constant 0.000000e+00 : f32
    %46 = vector.broadcast %cst_23 : f32 to vector<8x2xf32>
    %47 = vector.extract_strided_slice %6 {offsets = [1, 0, 0], sizes = [1, 8, 16], strides = [1, 1, 1]} : vector<2x8x16xf32> to vector<1x8x16xf32>
    %48 = vector.shape_cast %47 : vector<1x8x16xf32> to vector<8x16xf32>
    %cst_24 = arith.constant 0.000000e+00 : f32
    %49 = vector.broadcast %cst_24 : f32 to vector<8x112xf32>
    %50 = tpu.concatenate %46, %48, %49 in 1 : vector<8x2xf32>, vector<8x16xf32>, vector<8x112xf32> -> vector<8x130xf32>
    %51 = vector.extract_strided_slice %50 {offsets = [0, 0], sizes = [8, 128], strides = [1, 1]} : vector<8x130xf32> to vector<8x128xf32>
    %52 = vector.extract_strided_slice %50 {offsets = [0, 1], sizes = [8, 128], strides = [1, 1]} : vector<8x130xf32> to vector<8x128xf32>
    %53 = vector.extract_strided_slice %50 {offsets = [0, 2], sizes = [8, 128], strides = [1, 1]} : vector<8x130xf32> to vector<8x128xf32>
    %54 = tpu.concatenate %51, %52, %53 in 0 : vector<8x128xf32>, vector<8x128xf32>, vector<8x128xf32> -> vector<24x128xf32>
    %cst_25 = arith.constant dense<0.000000e+00> : vector<32x128xf32>
    %55 = tpu.matmul %0, %54, %cst_25 {dimension_numbers = #tpu.dot_dimension_numbers<[1], [0], [0], [1], [0, 0, 1, 1], [], []>} : vector<32x24xf32>, vector<24x128xf32>, vector<32x128xf32> -> vector<32x128xf32>
    %56 = vector.broadcast %3 : vector<32x1xf32> to vector<32x128xf32>
    %57 = arith.addf %55, %56 : vector<32x128xf32>
    %cst_26 = arith.constant 0.000000e+00 : f32
    %58 = vector.broadcast %cst_26 : f32 to vector<32x128xf32>
    %59 = arith.maximumf %57, %58 : vector<32x128xf32>
    %cst_27 = arith.constant 0.000000e+00 : f32
    %60 = vector.broadcast %cst_27 : f32 to vector<32x2xf32>
    %61 = tpu.concatenate %60, %59 in 1 : vector<32x2xf32>, vector<32x128xf32> -> vector<32x130xf32>
    %62 = vector.extract_strided_slice %61 {offsets = [0, 0], sizes = [32, 128], strides = [1, 1]} : vector<32x130xf32> to vector<32x128xf32>
    %63 = vector.extract_strided_slice %61 {offsets = [0, 1], sizes = [32, 128], strides = [1, 1]} : vector<32x130xf32> to vector<32x128xf32>
    %64 = vector.extract_strided_slice %61 {offsets = [0, 2], sizes = [32, 128], strides = [1, 1]} : vector<32x130xf32> to vector<32x128xf32>
    %65 = tpu.concatenate %62, %63, %64 in 0 : vector<32x128xf32>, vector<32x128xf32>, vector<32x128xf32> -> vector<96x128xf32>
    %cst_28 = arith.constant dense<0.000000e+00> : vector<32x128xf32>
    %66 = tpu.matmul %1, %65, %cst_28 {dimension_numbers = #tpu.dot_dimension_numbers<[1], [0], [0], [1], [0, 0, 1, 1], [], []>} : vector<32x96xf32>, vector<96x128xf32>, vector<32x128xf32> -> vector<32x128xf32>
    %67 = vector.broadcast %4 : vector<32x1xf32> to vector<32x128xf32>
    %68 = arith.addf %66, %67 : vector<32x128xf32>
    %cst_29 = arith.constant 0.000000e+00 : f32
    %69 = vector.broadcast %cst_29 : f32 to vector<32x128xf32>
    %70 = arith.maximumf %68, %69 : vector<32x128xf32>
    %71 = vector.extract_strided_slice %50 {offsets = [0, 2], sizes = [8, 128], strides = [1, 1]} : vector<8x130xf32> to vector<8x128xf32>
    %cst_30 = arith.constant dense<0.000000e+00> : vector<32x128xf32>
    %72 = tpu.matmul %2, %71, %cst_30 {dimension_numbers = #tpu.dot_dimension_numbers<[1], [0], [0], [1], [0, 0, 1, 1], [], []>} : vector<32x8xf32>, vector<8x128xf32>, vector<32x128xf32> -> vector<32x128xf32>
    %73 = vector.broadcast %5 : vector<32x1xf32> to vector<32x128xf32>
    %74 = arith.addf %72, %73 : vector<32x128xf32>
    %75 = arith.mulf %70, %11 : vector<32x128xf32>
    %cst_31 = arith.constant dense<0.000000e+00> : vector<32xf32>
    %76 = vector.multi_reduction <add>, %75, %cst_31 [1] : vector<32x128xf32> to vector<32xf32>
    %77 = vector.shape_cast %76 : vector<32xf32> to vector<32x1xf32>
    %cst_32 = arith.constant 6.250000e-02 : f32
    %78 = vector.broadcast %cst_32 : f32 to vector<32x1xf32>
    %79 = arith.mulf %77, %78 : vector<32x1xf32>
    %80 = tpu.concatenate %45, %79 in 1 : vector<32x1xf32>, vector<32x1xf32> -> vector<32x2xf32>
    %c0_33 = arith.constant 0 : index
    %c0_34 = arith.constant 0 : index
    %81 = vector.load %arg6[%c0_33, %c0_34] : memref<2x32xf32, #tpu.memory_space<vmem>>, vector<2x32xf32>
    %cst_35 = arith.constant dense<0.000000e+00> : vector<2x2xf32>
    %82 = tpu.matmul %81, %80, %cst_35 {dimension_numbers = #tpu.dot_dimension_numbers<[1], [0], [0], [1], [0, 0, 1, 1], [], []>} : vector<2x32xf32>, vector<32x2xf32>, vector<2x2xf32> -> vector<2x2xf32>
    %c0_36 = arith.constant 0 : index
    %c0_37 = arith.constant 0 : index
    %83 = vector.load %arg7[%c0_36, %c0_37] : memref<2x1xf32, #tpu.memory_space<vmem>>, vector<2x1xf32>
    %84 = vector.broadcast %83 : vector<2x1xf32> to vector<2x2xf32>
    %85 = arith.addf %82, %84 : vector<2x2xf32>
    %cst_38 = arith.constant 0.000000e+00 : f32
    %86 = vector.broadcast %cst_38 : f32 to vector<2x2xf32>
    %87 = arith.maximumf %85, %86 : vector<2x2xf32>
    %c0_39 = arith.constant 0 : index
    %c0_40 = arith.constant 0 : index
    %88 = vector.load %arg8[%c0_39, %c0_40] : memref<32x2xf32, #tpu.memory_space<vmem>>, vector<32x2xf32>
    %cst_41 = arith.constant dense<0.000000e+00> : vector<32x2xf32>
    %89 = tpu.matmul %88, %87, %cst_41 {dimension_numbers = #tpu.dot_dimension_numbers<[1], [0], [0], [1], [0, 0, 1, 1], [], []>} : vector<32x2xf32>, vector<2x2xf32>, vector<32x2xf32> -> vector<32x2xf32>
    %c0_42 = arith.constant 0 : index
    %c0_43 = arith.constant 0 : index
    %90 = vector.load %arg9[%c0_42, %c0_43] : memref<32x1xf32, #tpu.memory_space<vmem>>, vector<32x1xf32>
    %91 = vector.broadcast %90 : vector<32x1xf32> to vector<32x2xf32>
    %92 = arith.addf %89, %91 : vector<32x2xf32>
    %93 = arith.negf %92 : vector<32x2xf32>
    %94 = math.exp %93 : vector<32x2xf32>
    %cst_44 = arith.constant 1.000000e+00 : f32
    %95 = vector.broadcast %cst_44 : f32 to vector<32x2xf32>
    %96 = arith.addf %95, %94 : vector<32x2xf32>
    %97 = arith.divf %95, %96 : vector<32x2xf32>
    %98 = vector.extract_strided_slice %97 {offsets = [0, 0], sizes = [32, 1], strides = [1, 1]} : vector<32x2xf32> to vector<32x1xf32>
    %99 = vector.broadcast %98 : vector<32x1xf32> to vector<32x128xf32>
    %100 = arith.mulf %36, %99 : vector<32x128xf32>
    %101 = arith.addf %100, %40 : vector<32x128xf32>
    %cst_45 = arith.constant 0.000000e+00 : f32
    %102 = vector.broadcast %cst_45 : f32 to vector<32x128xf32>
    %103 = arith.maximumf %101, %102 : vector<32x128xf32>
    %c0_46 = arith.constant 0 : index
    %c0_47 = arith.constant 0 : index
    %c0_48 = arith.constant 0 : index
    %104 = vector.load %arg12[%c0_46, %c0_47, %c0_48] : memref<2x32x128xf32, #tpu.memory_space<vmem>>, vector<1x32x128xf32>
    %105 = vector.shape_cast %104 : vector<1x32x128xf32> to vector<32x128xf32>
    %106 = vector.shape_cast %103 : vector<32x128xf32> to vector<1x32x128xf32>
    tpu.vector_store %arg12[%c0_46, %c0_47, %c0_48], %106 {strides = array<i32>} : memref<2x32x128xf32, #tpu.memory_space<vmem>>, vector<1x32x128xf32>,
    %107 = vector.extract_strided_slice %97 {offsets = [0, 1], sizes = [32, 1], strides = [1, 1]} : vector<32x2xf32> to vector<32x1xf32>
    %108 = vector.broadcast %107 : vector<32x1xf32> to vector<32x128xf32>
    %109 = arith.mulf %70, %108 : vector<32x128xf32>
    %110 = arith.addf %109, %74 : vector<32x128xf32>
    %cst_49 = arith.constant 0.000000e+00 : f32
    %111 = vector.broadcast %cst_49 : f32 to vector<32x128xf32>
    %112 = arith.maximumf %110, %111 : vector<32x128xf32>
    %c1 = arith.constant 1 : index
    %c0_50 = arith.constant 0 : index
    %c0_51 = arith.constant 0 : index
    %113 = vector.load %arg12[%c1, %c0_50, %c0_51] : memref<2x32x128xf32, #tpu.memory_space<vmem>>, vector<1x32x128xf32>
    %114 = vector.shape_cast %113 : vector<1x32x128xf32> to vector<32x128xf32>
    %115 = vector.shape_cast %112 : vector<32x128xf32> to vector<1x32x128xf32>
    tpu.vector_store %arg12[%c1, %c0_50, %c0_51], %115 {strides = array<i32>} : memref<2x32x128xf32, #tpu.memory_space<vmem>>, vector<1x32x128xf32>,
    return
  }
  func.func @transform_0(%arg0: i32) -> (i32, i32, i32) {
    %c0_i32 = arith.constant 0 : i32
    %c0_i32_0 = arith.constant 0 : i32
    %c0_i32_1 = arith.constant 0 : i32
    return %arg0, %c0_i32, %c0_i32_0 : i32, i32, i32
  }
  func.func @transform_1(%arg0: i32) -> (i32, i32) {
    %c0_i32 = arith.constant 0 : i32
    %c0_i32_0 = arith.constant 0 : i32
    %c0_i32_1 = arith.constant 0 : i32
    return %c0_i32, %c0_i32_0 : i32, i32
  }
  func.func @transform_2(%arg0: i32) -> (i32, i32) {
    %c0_i32 = arith.constant 0 : i32
    %c0_i32_0 = arith.constant 0 : i32
    %c0_i32_1 = arith.constant 0 : i32
    return %c0_i32, %c0_i32_0 : i32, i32
  }
  func.func @transform_3(%arg0: i32) -> (i32, i32) {
    %c0_i32 = arith.constant 0 : i32
    %c0_i32_0 = arith.constant 0 : i32
    %c0_i32_1 = arith.constant 0 : i32
    return %c0_i32, %c0_i32_0 : i32, i32
  }
  func.func @transform_4(%arg0: i32) -> (i32, i32) {
    %c0_i32 = arith.constant 0 : i32
    %c0_i32_0 = arith.constant 0 : i32
    %c0_i32_1 = arith.constant 0 : i32
    return %c0_i32, %c0_i32_0 : i32, i32
  }
  func.func @transform_5(%arg0: i32) -> (i32, i32) {
    %c0_i32 = arith.constant 0 : i32
    %c0_i32_0 = arith.constant 0 : i32
    %c0_i32_1 = arith.constant 0 : i32
    return %c0_i32, %c0_i32_0 : i32, i32
  }
  func.func @transform_6(%arg0: i32) -> (i32, i32) {
    %c0_i32 = arith.constant 0 : i32
    %c0_i32_0 = arith.constant 0 : i32
    %c0_i32_1 = arith.constant 0 : i32
    return %c0_i32, %c0_i32_0 : i32, i32
  }
  func.func @transform_7(%arg0: i32) -> (i32, i32) {
    %c0_i32 = arith.constant 0 : i32
    %c0_i32_0 = arith.constant 0 : i32
    %c0_i32_1 = arith.constant 0 : i32
    return %c0_i32, %c0_i32_0 : i32, i32
  }
  func.func @transform_8(%arg0: i32) -> (i32, i32) {
    %c0_i32 = arith.constant 0 : i32
    %c0_i32_0 = arith.constant 0 : i32
    %c0_i32_1 = arith.constant 0 : i32
    return %c0_i32, %c0_i32_0 : i32, i32
  }
  func.func @transform_9(%arg0: i32) -> (i32, i32) {
    %c0_i32 = arith.constant 0 : i32
    %c0_i32_0 = arith.constant 0 : i32
    %c0_i32_1 = arith.constant 0 : i32
    return %c0_i32, %c0_i32_0 : i32, i32
  }
  func.func @transform_10(%arg0: i32) -> (i32, i32) {
    %c0_i32 = arith.constant 0 : i32
    %c0_i32_0 = arith.constant 0 : i32
    %c0_i32_1 = arith.constant 0 : i32
    return %c0_i32, %c0_i32_0 : i32, i32
  }
  func.func @transform_11(%arg0: i32) -> (i32, i32, i32) {
    %c0_i32 = arith.constant 0 : i32
    %c0_i32_0 = arith.constant 0 : i32
    %c0_i32_1 = arith.constant 0 : i32
    return %arg0, %c0_i32, %c0_i32_0 : i32, i32, i32
  }
}

</mosaic_0001>

<llo_original>
// kernel: tpu_custom_call.1
$region0: #{tpu_custom_call.1}
  #allocation0 [shape = 'u32[]', space=smem, size = 0x4, offset = 0x4, fixed_abs, tag = 'smem constant byte address 0x4 - core index']
  #allocation1 [shape = 'u32[72,128]{1,0:T(1,128)}', space=vmem, size = 0x9000, scoped, tag = 'internal scratch']
  %s0 = inlined_call_operand.vmem [shape: f32[2,8,16], index: 0, kind: input, shape index: {}]
  %s1 = inlined_call_operand.vmem [shape: f32[32,24], index: 1, kind: input, shape index: {}]
  %s2 = inlined_call_operand.vmem [shape: f32[32,1], index: 2, kind: input, shape index: {}]
  %s3 = inlined_call_operand.vmem [shape: f32[32,96], index: 3, kind: input, shape index: {}]
  %s4 = inlined_call_operand.vmem [shape: f32[32,1], index: 4, kind: input, shape index: {}]
  %s5 = inlined_call_operand.vmem [shape: f32[2,32], index: 5, kind: input, shape index: {}]
  %s6 = inlined_call_operand.vmem [shape: f32[2,1], index: 6, kind: input, shape index: {}]
  %s7 = inlined_call_operand.vmem [shape: f32[32,2], index: 7, kind: input, shape index: {}]
  %s8 = inlined_call_operand.vmem [shape: f32[32,1], index: 8, kind: input, shape index: {}]
  %s9 = inlined_call_operand.vmem [shape: f32[32,8], index: 9, kind: input, shape index: {}]
  %s10 = inlined_call_operand.vmem [shape: f32[32,1], index: 10, kind: input, shape index: {}]
  %s11 = inlined_call_operand.hbm [shape: f32[2,32,128], index: 11, kind: output, shape index: {}]
  %s12 = sld [smem:[#allocation0]]
  $region54: #{tpu_custom_call.1} parent=0
    _
  %s14 = ssub.s32 1, %s12
  %s15 = scalar_select 0, %s14, %s12
  $region1: #{tpu_custom_call.1} parent=0
    #allocation2 [shape = 'u8[32768]{0}', space=vmem, size = 0x8000, scoped, tag = 'output window, operand 0, single buffered']
    #allocation3 [shape = 's32[1]{0}', space=sflag, size = 0x4, scoped, tag = 'scoped memory for tpu_custom_call.1']
    %16 = vsyncpa [#allocation3], 0
    // Predicated region
    $region2: #{tpu_custom_call.1} parent=1 // pred_check
      _
    $region3: #{tpu_custom_call.1} parent=1 // pred_check_branch
      %18 = sbr.rel (0) target = $region5
    $region4: #{tpu_custom_call.1} parent=1 // pred_region
      _
    $region5: #{tpu_custom_call.1} parent=1 // pred_fallthru
      _
    // Predicated region
    $region6: #{tpu_custom_call.1} parent=1 // pred_check
      _
    $region7: #{tpu_custom_call.1} parent=1 // pred_check_branch
      %20 = sbr.rel (0) target = $region9
    $region8: #{tpu_custom_call.1} parent=1 // pred_region
      _
    $region9: #{tpu_custom_call.1} parent=1 // pred_fallthru
      _
    // Predicated region
    $region10: #{tpu_custom_call.1} parent=1 // pred_check
      _
    $region11: #{tpu_custom_call.1} parent=1 // pred_check_branch
      %22 = sbr.rel (0) target = $region13
    $region12: #{tpu_custom_call.1} parent=1 // pred_region
      _
    $region13: #{tpu_custom_call.1} parent=1 // pred_fallthru
      _
    // Predicated region
    $region14: #{tpu_custom_call.1} parent=1 // pred_check
      _
    $region15: #{tpu_custom_call.1} parent=1 // pred_check_branch
      %24 = sbr.rel (0) target = $region17
    $region16: #{tpu_custom_call.1} parent=1 // pred_region
      _
    $region17: #{tpu_custom_call.1} parent=1 // pred_fallthru
      _
    // Predicated region
    $region18: #{tpu_custom_call.1} parent=1 // pred_check
      _
    $region19: #{tpu_custom_call.1} parent=1 // pred_check_branch
      %26 = sbr.rel (0) target = $region21
    $region20: #{tpu_custom_call.1} parent=1 // pred_region
      _
    $region21: #{tpu_custom_call.1} parent=1 // pred_fallthru
      _
    // Predicated region
    $region22: #{tpu_custom_call.1} parent=1 // pred_check
      _
    $region23: #{tpu_custom_call.1} parent=1 // pred_check_branch
      %28 = sbr.rel (0) target = $region25
    $region24: #{tpu_custom_call.1} parent=1 // pred_region
      _
    $region25: #{tpu_custom_call.1} parent=1 // pred_fallthru
      _
    // Predicated region
    $region26: #{tpu_custom_call.1} parent=1 // pred_check
      _
    $region27: #{tpu_custom_call.1} parent=1 // pred_check_branch
      %30 = sbr.rel (0) target = $region29
    $region28: #{tpu_custom_call.1} parent=1 // pred_region
      _
    $region29: #{tpu_custom_call.1} parent=1 // pred_fallthru
      _
    // Predicated region
    $region30: #{tpu_custom_call.1} parent=1 // pred_check
      _
    $region31: #{tpu_custom_call.1} parent=1 // pred_check_branch
      %32 = sbr.rel (0) target = $region33
    $region32: #{tpu_custom_call.1} parent=1 // pred_region
      _
    $region33: #{tpu_custom_call.1} parent=1 // pred_fallthru
      _
    // Predicated region
    $region34: #{tpu_custom_call.1} parent=1 // pred_check
      _
    $region35: #{tpu_custom_call.1} parent=1 // pred_check_branch
      %34 = sbr.rel (0) target = $region37
    $region36: #{tpu_custom_call.1} parent=1 // pred_region
      _
    $region37: #{tpu_custom_call.1} parent=1 // pred_fallthru
      _
    // Predicated region
    $region38: #{tpu_custom_call.1} parent=1 // pred_check
      _
    $region39: #{tpu_custom_call.1} parent=1 // pred_check_branch
      %36 = sbr.rel (0) target = $region41
    $region40: #{tpu_custom_call.1} parent=1 // pred_region
      _
    $region41: #{tpu_custom_call.1} parent=1 // pred_fallthru
      _
    // Predicated region
    $region42: #{tpu_custom_call.1} parent=1 // pred_check
      _
    $region43: #{tpu_custom_call.1} parent=1 // pred_check_branch
      %38 = sbr.rel (0) target = $region45
    $region44: #{tpu_custom_call.1} parent=1 // pred_region
      _
    $region45: #{tpu_custom_call.1} parent=1 // pred_fallthru
      _
    %v39 = vld [vmem:[%s1] sm:$0xff]
    %v40 = vld [vmem:[%s1 + $0x8] sm:$0xff]
    %v41 = vld [vmem:[%s1 + $0x10] sm:$0xff]
    %v42 = vld [vmem:[%s1 + $0x18] sm:$0xff]
    %v43 = vld [vmem:[%s3] sm:$0xff]
    %v44 = vld [vmem:[%s3 + $0x8] sm:$0xff]
    %v45 = vld [vmem:[%s3 + $0x10] sm:$0xff]
    %v46 = vld [vmem:[%s3 + $0x18] sm:$0xff]
    %v47 = vld [vmem:[%s9] sm:$0xff]
    %v48 = vld [vmem:[%s9 + $0x8] sm:$0xff]
    %v49 = vld [vmem:[%s9 + $0x10] sm:$0xff]
    %v50 = vld [vmem:[%s9 + $0x18] sm:$0xff]
    %v51 = vld [vmem:[%s2] sm:$0xff]
    %v52 = vld [vmem:[%s2 + $0x8] sm:$0xff]
    %v53 = vld [vmem:[%s2 + $0x10] sm:$0xff]
    %v54 = vld [vmem:[%s2 + $0x18] sm:$0xff]
    %v55 = vld [vmem:[%s4] sm:$0xff]
    %v56 = vld [vmem:[%s4 + $0x8] sm:$0xff]
    %v57 = vld [vmem:[%s4 + $0x10] sm:$0xff]
    %v58 = vld [vmem:[%s4 + $0x18] sm:$0xff]
    %v59 = vld [vmem:[%s10] sm:$0xff]
    %v60 = vld [vmem:[%s10 + $0x8] sm:$0xff]
    %v61 = vld [vmem:[%s10 + $0x10] sm:$0xff]
    %v62 = vld [vmem:[%s10 + $0x18] sm:$0xff]
    %v63 = vld [vmem:[%s0] sm:$0xff]
    %v64 = vld [vmem:[%s0 + $0x8] sm:$0xff]
    %v65 = vlaneseq
    %v66 = vand.u32 %v65, 127
    %vm67 = vcmp.lt.s32.totalorder %v66, 16
    %v68 = vsel %vm67, 1, 0
    %v69 = vcvt.s32.f32 %v68
    %71 = vrot.lane.b32.xlu0 %v63, 2
    %v72 = vpop.permute.xlu0 %71
    %vm74 = vcmask 15360
    %v75 = vsel %vm74, 0.0, %v72
    %vm76 = vcmask 146432
    %v77 = vsel %vm76, %v75, 0.0
    %80 = vrot.lane.b32.xlu0 %v77, 127
    %v81 = vpop.permute.xlu0 %80
    %82 = vrot.lane.b32.xlu0 0.0, 127
    %v83 = vpop.permute.xlu0 %82
    %vm84 = vcmask 1039360
    %v85 = vsel %vm84, %v81, %v83
    %87 = vrot.lane.b32.xlu0 %v77, 126
    %v88 = vpop.permute.xlu0 %87
    %89 = vrot.lane.b32.xlu0 0.0, 126
    %v90 = vpop.permute.xlu0 %89
    %vm91 = vcmask 1031168
    %v92 = vsel %vm91, %v88, %v90
    %95 = vset.pattern.permute.xlu0 0
    %96 = vperm.xlu0 %95, %v51
    %v97 = vpop.permute.xlu0 %96
    %100 = vset.pattern.permute.xlu0 0
    %101 = vperm.xlu0 %100, %v52
    %v102 = vpop.permute.xlu0 %101
    %105 = vset.pattern.permute.xlu0 0
    %106 = vperm.xlu0 %105, %v53
    %v107 = vpop.permute.xlu0 %106
    %110 = vset.pattern.permute.xlu0 0
    %111 = vperm.xlu0 %110, %v54
    %v112 = vpop.permute.xlu0 %111
    %vm114 = vcmask 195584
    %v116 = vsel %vm114, %v39, 0
    %v119 = vsel %vm114, %v40, 0
    %v122 = vsel %vm114, %v41, 0
    %v125 = vsel %vm114, %v42, 0
    %127 = vmatpush.msra.mxu0 0.0
    %128 = vmatpush.msra.mxu0 0.0
    %129 = vmatpush.msra.mxu0 0.0
    %130 = vmatpush.msra.mxu0 0.0
    %131 = vmatpush.msra.mxu0 0.0
    %132 = vmatpush.msra.mxu0 0.0
    %133 = vmatpush.msra.mxu0 0.0
    %134 = vmatpush.msra.mxu0 0.0
    %135 = vmatpush.msra.mxu0 0.0
    %136 = vmatpush.msra.mxu0 0.0
    %137 = vmatpush.msra.mxu0 0.0
    %138 = vmatpush.msra.mxu0 0.0
    %139 = vmatpush.msra.mxu0 0.0
    %140 = vmatpush.msra.mxu0 %v92
    %141 = vmatpush.msra.mxu0 %v85
    %142 = vmatpush.msra.mxu0 %v77
    %143 = vmatmul.f32.gmra.mxu0 %v116
    %v144 = vpop.f32.mrf.mxu0
    %v145 = vadd.f32 %v97, %v144
    %146 = vmatmul.f32.gmra.mxu0 %v119
    %v147 = vpop.f32.mrf.mxu0
    %v148 = vadd.f32 %v102, %v147
    %149 = vmatmul.f32.gmra.mxu0 %v122
    %v150 = vpop.f32.mrf.mxu0
    %v151 = vadd.f32 %v107, %v150
    %152 = vmatmul.f32.gmra.mxu0 %v125
    %v153 = vpop.f32.mrf.mxu0
    %v154 = vadd.f32 %v112, %v153
    %155 = vdwg.mxu0
    %v156 = vmax.f32 %v145, 0.0
    %v157 = vmax.f32 %v148, 0.0
    %v158 = vmax.f32 %v151, 0.0
    %v159 = vmax.f32 %v154, 0.0
    %164 = vrot.lane.b32.xlu0 %v156, 2
    %v165 = vpop.permute.xlu0 %164
    %166 = vrot.lane.b32.xlu0 %v157, 2
    %v167 = vpop.permute.xlu0 %166
    %168 = vrot.lane.b32.xlu0 %v158, 2
    %v169 = vpop.permute.xlu0 %168
    %170 = vrot.lane.b32.xlu0 %v159, 2
    %v171 = vpop.permute.xlu0 %170
    %v176 = vsel %vm74, 0.0, %v165
    %v177 = vsel %vm74, 0.0, %v167
    %v178 = vsel %vm74, 0.0, %v169
    %v179 = vsel %vm74, 0.0, %v171
    %184 = vrot.lane.b32.xlu0 %v176, 127
    %v185 = vpop.permute.xlu0 %184
    %186 = vrot.lane.b32.xlu0 %v165, 127
    %v187 = vpop.permute.xlu0 %186
    %188 = vrot.lane.b32.xlu0 %v177, 127
    %v189 = vpop.permute.xlu0 %188
    %190 = vrot.lane.b32.xlu0 %v167, 127
    %v191 = vpop.permute.xlu0 %190
    %192 = vrot.lane.b32.xlu0 %v178, 127
    %v193 = vpop.permute.xlu0 %192
    %194 = vrot.lane.b32.xlu0 %v169, 127
    %v195 = vpop.permute.xlu0 %194
    %196 = vrot.lane.b32.xlu0 %v179, 127
    %v197 = vpop.permute.xlu0 %196
    %198 = vrot.lane.b32.xlu0 %v171, 127
    %v199 = vpop.permute.xlu0 %198
    %v200 = vsel %vm84, %v185, %v187
    %v201 = vsel %vm84, %v189, %v191
    %v202 = vsel %vm84, %v193, %v195
    %v203 = vsel %vm84, %v197, %v199
    %208 = vrot.lane.b32.xlu0 %v176, 126
    %v209 = vpop.permute.xlu0 %208
    %210 = vrot.lane.b32.xlu0 %v165, 126
    %v211 = vpop.permute.xlu0 %210
    %212 = vrot.lane.b32.xlu0 %v177, 126
    %v213 = vpop.permute.xlu0 %212
    %214 = vrot.lane.b32.xlu0 %v167, 126
    %v215 = vpop.permute.xlu0 %214
    %216 = vrot.lane.b32.xlu0 %v178, 126
    %v217 = vpop.permute.xlu0 %216
    %218 = vrot.lane.b32.xlu0 %v169, 126
    %v219 = vpop.permute.xlu0 %218
    %220 = vrot.lane.b32.xlu0 %v179, 126
    %v221 = vpop.permute.xlu0 %220
    %222 = vrot.lane.b32.xlu0 %v171, 126
    %v223 = vpop.permute.xlu0 %222
    %v224 = vsel %vm91, %v209, %v211
    %v225 = vsel %vm91, %v213, %v215
    %v226 = vsel %vm91, %v217, %v219
    %v227 = vsel %vm91, %v221, %v223
    %233 = vset.pattern.permute.xlu0 0
    %234 = vperm.xlu0 %233, %v55
    %v235 = vpop.permute.xlu0 %234
    %238 = vset.pattern.permute.xlu0 0
    %239 = vperm.xlu0 %238, %v56
    %v240 = vpop.permute.xlu0 %239
    %243 = vset.pattern.permute.xlu0 0
    %244 = vperm.xlu0 %243, %v57
    %v245 = vpop.permute.xlu0 %244
    %248 = vset.pattern.permute.xlu0 0
    %249 = vperm.xlu0 %248, %v58
    %v250 = vpop.permute.xlu0 %249
    %vm252 = vcmask 785408
    %v254 = vsel %vm252, %v43, 0
    %v257 = vsel %vm252, %v44, 0
    %v260 = vsel %vm252, %v45, 0
    %v263 = vsel %vm252, %v46, 0
    %265 = vmatpush.msra.mxu0 0.0
    %266 = vmatpush.msra.mxu0 0.0
    %267 = vmatpush.msra.mxu0 0.0
    %268 = vmatpush.msra.mxu0 0.0
    %269 = vmatpush.msra.mxu0 %v227
    %270 = vmatpush.msra.mxu0 %v226
    %271 = vmatpush.msra.mxu0 %v225
    %272 = vmatpush.msra.mxu0 %v224
    %273 = vmatpush.msra.mxu0 %v203
    %274 = vmatpush.msra.mxu0 %v202
    %275 = vmatpush.msra.mxu0 %v201
    %276 = vmatpush.msra.mxu0 %v200
    %277 = vmatpush.msra.mxu0 %v179
    %278 = vmatpush.msra.mxu0 %v178
    %279 = vmatpush.msra.mxu0 %v177
    %280 = vmatpush.msra.mxu0 %v176
    %281 = vmatmul.f32.gmra.mxu0 %v254
    %v282 = vpop.f32.mrf.mxu0
    %v283 = vadd.f32 %v235, %v282
    %284 = vmatmul.f32.gmra.mxu0 %v257
    %v285 = vpop.f32.mrf.mxu0
    %v286 = vadd.f32 %v240, %v285
    %287 = vmatmul.f32.gmra.mxu0 %v260
    %v288 = vpop.f32.mrf.mxu0
    %v289 = vadd.f32 %v245, %v288
    %290 = vmatmul.f32.gmra.mxu0 %v263
    %v291 = vpop.f32.mrf.mxu0
    %v292 = vadd.f32 %v250, %v291
    %293 = vdwg.mxu0
    %v294 = vmax.f32 %v283, 0.0
    %v295 = vmax.f32 %v286, 0.0
    %v296 = vmax.f32 %v289, 0.0
    %v297 = vmax.f32 %v292, 0.0
    %299 = vset.pattern.permute.xlu0 0
    %300 = vperm.xlu0 %299, %v59
    %v301 = vpop.permute.xlu0 %300
    %304 = vset.pattern.permute.xlu0 0
    %305 = vperm.xlu0 %304, %v60
    %v306 = vpop.permute.xlu0 %305
    %309 = vset.pattern.permute.xlu0 0
    %310 = vperm.xlu0 %309, %v61
    %v311 = vpop.permute.xlu0 %310
    %314 = vset.pattern.permute.xlu0 0
    %315 = vperm.xlu0 %314, %v62
    %v316 = vpop.permute.xlu0 %315
    %vm318 = vcmask 64512
    %v320 = vsel %vm318, %v47, 0
    %v323 = vsel %vm318, %v48, 0
    %v326 = vsel %vm318, %v49, 0
    %v329 = vsel %vm318, %v50, 0
    %331 = vmatpush.msra.mxu0 0.0
    %332 = vmatpush.msra.mxu0 0.0
    %333 = vmatpush.msra.mxu0 0.0
    %334 = vmatpush.msra.mxu0 0.0
    %335 = vmatpush.msra.mxu0 0.0
    %336 = vmatpush.msra.mxu0 0.0
    %337 = vmatpush.msra.mxu0 0.0
    %338 = vmatpush.msra.mxu0 0.0
    %339 = vmatpush.msra.mxu0 0.0
    %340 = vmatpush.msra.mxu0 0.0
    %341 = vmatpush.msra.mxu0 0.0
    %342 = vmatpush.msra.mxu0 0.0
    %343 = vmatpush.msra.mxu0 0.0
    %344 = vmatpush.msra.mxu0 0.0
    %345 = vmatpush.msra.mxu0 0.0
    %346 = vmatpush.msra.mxu0 %v92
    %347 = vmatmul.f32.gmra.mxu0 %v320
    %v348 = vpop.f32.mrf.mxu0
    %v349 = vadd.f32 %v301, %v348
    %350 = vmatmul.f32.gmra.mxu0 %v323
    %v351 = vpop.f32.mrf.mxu0
    %v352 = vadd.f32 %v306, %v351
    %353 = vmatmul.f32.gmra.mxu0 %v326
    %v354 = vpop.f32.mrf.mxu0
    %v355 = vadd.f32 %v311, %v354
    %356 = vmatmul.f32.gmra.mxu0 %v329
    %v357 = vpop.f32.mrf.mxu0
    %v358 = vadd.f32 %v316, %v357
    %359 = vdwg.mxu0
    %v360 = vmul.f32 %v294, %v69
    %v361 = vmul.f32 %v295, %v69
    %v362 = vmul.f32 %v296, %v69
    %v363 = vmul.f32 %v297, %v69
    %364 = vadd.xlane.f32.xlu0 %v360
    %v365 = vpop.xlane.xlu0 %364
    %366 = vadd.xlane.f32.xlu0 %v361
    %v367 = vpop.xlane.xlu0 %366
    %368 = vadd.xlane.f32.xlu0 %v362
    %v369 = vpop.xlane.xlu0 %368
    %370 = vadd.xlane.f32.xlu0 %v363
    %v371 = vpop.xlane.xlu0 %370
    %v372 = vmul.f32 %v365, 0.0625
    %v373 = vmul.f32 %v367, 0.0625
    %v374 = vmul.f32 %v369, 0.0625
    %v375 = vmul.f32 %v371, 0.0625
    %377 = vrot.lane.b32.xlu0 %v64, 2
    %v378 = vpop.permute.xlu0 %377
    %v380 = vsel %vm74, 0.0, %v378
    %v381 = vsel %vm76, %v380, 0.0
    %383 = vrot.lane.b32.xlu0 %v381, 127
    %v384 = vpop.permute.xlu0 %383
    %v385 = vsel %vm84, %v384, %v83
    %387 = vrot.lane.b32.xlu0 %v381, 126
    %v388 = vpop.permute.xlu0 %387
    %v389 = vsel %vm91, %v388, %v90
    %391 = vmatpush.msra.mxu0 0.0
    %392 = vmatpush.msra.mxu0 0.0
    %393 = vmatpush.msra.mxu0 0.0
    %394 = vmatpush.msra.mxu0 0.0
    %395 = vmatpush.msra.mxu0 0.0
    %396 = vmatpush.msra.mxu0 0.0
    %397 = vmatpush.msra.mxu0 0.0
    %398 = vmatpush.msra.mxu0 0.0
    %399 = vmatpush.msra.mxu0 0.0
    %400 = vmatpush.msra.mxu0 0.0
    %401 = vmatpush.msra.mxu0 0.0
    %402 = vmatpush.msra.mxu0 0.0
    %403 = vmatpush.msra.mxu0 0.0
    %404 = vmatpush.msra.mxu0 %v389
    %405 = vmatpush.msra.mxu0 %v385
    %406 = vmatpush.msra.mxu0 %v381
    %407 = vmatmul.f32.gmra.mxu0 %v116
    %v408 = vpop.f32.mrf.mxu0
    %v409 = vadd.f32 %v97, %v408
    %410 = vmatmul.f32.gmra.mxu0 %v119
    %v411 = vpop.f32.mrf.mxu0
    %v412 = vadd.f32 %v102, %v411
    %413 = vmatmul.f32.gmra.mxu0 %v122
    %v414 = vpop.f32.mrf.mxu0
    %v415 = vadd.f32 %v107, %v414
    %416 = vmatmul.f32.gmra.mxu0 %v125
    %v417 = vpop.f32.mrf.mxu0
    %v418 = vadd.f32 %v112, %v417
    %419 = vdwg.mxu0
    %v420 = vmax.f32 %v409, 0.0
    %v421 = vmax.f32 %v412, 0.0
    %v422 = vmax.f32 %v415, 0.0
    %v423 = vmax.f32 %v418, 0.0
    %428 = vrot.lane.b32.xlu0 %v420, 2
    %v429 = vpop.permute.xlu0 %428
    %430 = vrot.lane.b32.xlu0 %v421, 2
    %v431 = vpop.permute.xlu0 %430
    %432 = vrot.lane.b32.xlu0 %v422, 2
    %v433 = vpop.permute.xlu0 %432
    %434 = vrot.lane.b32.xlu0 %v423, 2
    %v435 = vpop.permute.xlu0 %434
    %v440 = vsel %vm74, 0.0, %v429
    %v441 = vsel %vm74, 0.0, %v431
    %v442 = vsel %vm74, 0.0, %v433
    %v443 = vsel %vm74, 0.0, %v435
    %448 = vrot.lane.b32.xlu0 %v440, 127
    %v449 = vpop.permute.xlu0 %448
    %450 = vrot.lane.b32.xlu0 %v429, 127
    %v451 = vpop.permute.xlu0 %450
    %452 = vrot.lane.b32.xlu0 %v441, 127
    %v453 = vpop.permute.xlu0 %452
    %454 = vrot.lane.b32.xlu0 %v431, 127
    %v455 = vpop.permute.xlu0 %454
    %456 = vrot.lane.b32.xlu0 %v442, 127
    %v457 = vpop.permute.xlu0 %456
    %458 = vrot.lane.b32.xlu0 %v433, 127
    %v459 = vpop.permute.xlu0 %458
    %460 = vrot.lane.b32.xlu0 %v443, 127
    %v461 = vpop.permute.xlu0 %460
    %462 = vrot.lane.b32.xlu0 %v435, 127
    %v463 = vpop.permute.xlu0 %462
    %v464 = vsel %vm84, %v449, %v451
    %v465 = vsel %vm84, %v453, %v455
    %v466 = vsel %vm84, %v457, %v459
    %v467 = vsel %vm84, %v461, %v463
    %472 = vrot.lane.b32.xlu0 %v440, 126
    %v473 = vpop.permute.xlu0 %472
    %474 = vrot.lane.b32.xlu0 %v429, 126
    %v475 = vpop.permute.xlu0 %474
    %476 = vrot.lane.b32.xlu0 %v441, 126
    %v477 = vpop.permute.xlu0 %476
    %478 = vrot.lane.b32.xlu0 %v431, 126
    %v479 = vpop.permute.xlu0 %478
    %480 = vrot.lane.b32.xlu0 %v442, 126
    %v481 = vpop.permute.xlu0 %480
    %482 = vrot.lane.b32.xlu0 %v433, 126
    %v483 = vpop.permute.xlu0 %482
    %484 = vrot.lane.b32.xlu0 %v443, 126
    %v485 = vpop.permute.xlu0 %484
    %486 = vrot.lane.b32.xlu0 %v435, 126
    %v487 = vpop.permute.xlu0 %486
    %v488 = vsel %vm91, %v473, %v475
    %v489 = vsel %vm91, %v477, %v479
    %v490 = vsel %vm91, %v481, %v483
    %v491 = vsel %vm91, %v485, %v487
    %496 = vmatpush.msra.mxu0 0.0
    %497 = vmatpush.msra.mxu0 0.0
    %498 = vmatpush.msra.mxu0 0.0
    %499 = vmatpush.msra.mxu0 0.0
    %500 = vmatpush.msra.mxu0 %v491
    %501 = vmatpush.msra.mxu0 %v490
    %502 = vmatpush.msra.mxu0 %v489
    %503 = vmatpush.msra.mxu0 %v488
    %504 = vmatpush.msra.mxu0 %v467
    %505 = vmatpush.msra.mxu0 %v466
    %506 = vmatpush.msra.mxu0 %v465
    %507 = vmatpush.msra.mxu0 %v464
    %508 = vmatpush.msra.mxu0 %v443
    %509 = vmatpush.msra.mxu0 %v442
    %510 = vmatpush.msra.mxu0 %v441
    %511 = vmatpush.msra.mxu0 %v440
    %512 = vmatmul.f32.gmra.mxu0 %v254
    %v513 = vpop.f32.mrf.mxu0
    %v514 = vadd.f32 %v235, %v513
    %515 = vmatmul.f32.gmra.mxu0 %v257
    %v516 = vpop.f32.mrf.mxu0
    %v517 = vadd.f32 %v240, %v516
    %518 = vmatmul.f32.gmra.mxu0 %v260
    %v519 = vpop.f32.mrf.mxu0
    %v520 = vadd.f32 %v245, %v519
    %521 = vmatmul.f32.gmra.mxu0 %v263
    %v522 = vpop.f32.mrf.mxu0
    %v523 = vadd.f32 %v250, %v522
    %524 = vdwg.mxu0
    %v525 = vmax.f32 %v514, 0.0
    %v526 = vmax.f32 %v517, 0.0
    %v527 = vmax.f32 %v520, 0.0
    %v528 = vmax.f32 %v523, 0.0
    %529 = vmatpush.msra.mxu0 0.0
    %530 = vmatpush.msra.mxu0 0.0
    %531 = vmatpush.msra.mxu0 0.0
    %532 = vmatpush.msra.mxu0 0.0
    %533 = vmatpush.msra.mxu0 0.0
    %534 = vmatpush.msra.mxu0 0.0
    %535 = vmatpush.msra.mxu0 0.0
    %536 = vmatpush.msra.mxu0 0.0
    %537 = vmatpush.msra.mxu0 0.0
    %538 = vmatpush.msra.mxu0 0.0
    %539 = vmatpush.msra.mxu0 0.0
    %540 = vmatpush.msra.mxu0 0.0
    %541 = vmatpush.msra.mxu0 0.0
    %542 = vmatpush.msra.mxu0 0.0
    %543 = vmatpush.msra.mxu0 0.0
    %544 = vmatpush.msra.mxu0 %v389
    %545 = vmatmul.f32.gmra.mxu0 %v320
    %v546 = vpop.f32.mrf.mxu0
    %v547 = vadd.f32 %v301, %v546
    %548 = vmatmul.f32.gmra.mxu0 %v323
    %v549 = vpop.f32.mrf.mxu0
    %v550 = vadd.f32 %v306, %v549
    %551 = vmatmul.f32.gmra.mxu0 %v326
    %v552 = vpop.f32.mrf.mxu0
    %v553 = vadd.f32 %v311, %v552
    %554 = vmatmul.f32.gmra.mxu0 %v329
    %v555 = vpop.f32.mrf.mxu0
    %v556 = vadd.f32 %v316, %v555
    %557 = vdwg.mxu0
    %v558 = vmul.f32 %v525, %v69
    %v559 = vmul.f32 %v526, %v69
    %v560 = vmul.f32 %v527, %v69
    %v561 = vmul.f32 %v528, %v69
    %562 = vadd.xlane.f32.xlu0 %v558
    %v563 = vpop.xlane.xlu0 %562
    %564 = vadd.xlane.f32.xlu0 %v559
    %v565 = vpop.xlane.xlu0 %564
    %566 = vadd.xlane.f32.xlu0 %v560
    %v567 = vpop.xlane.xlu0 %566
    %568 = vadd.xlane.f32.xlu0 %v561
    %v569 = vpop.xlane.xlu0 %568
    %v570 = vmul.f32 %v563, 0.0625
    %v571 = vmul.f32 %v565, 0.0625
    %v572 = vmul.f32 %v567, 0.0625
    %v573 = vmul.f32 %v569, 0.0625
    %vm574 = vcmask 7168
    %v575 = vsel %vm574, %v372, %v570
    %v576 = vsel %vm574, %v373, %v571
    %v577 = vsel %vm574, %v374, %v572
    %v578 = vsel %vm574, %v375, %v573
    %v579 = vld [vmem:[%s5] sm:$0x3]
    %v580 = vld [vmem:[%s6] sm:$0x3]
    %582 = vset.pattern.permute.xlu0 0
    %583 = vperm.xlu0 %582, %v580
    %v584 = vpop.permute.xlu0 %583
    %vm586 = vcmask 261120
    %v588 = vsel %vm586, %v579, 0
    %590 = vmatpush.msra.mxu0 0.0
    %591 = vmatpush.msra.mxu0 0.0
    %592 = vmatpush.msra.mxu0 0.0
    %593 = vmatpush.msra.mxu0 0.0
    %594 = vmatpush.msra.mxu0 0.0
    %595 = vmatpush.msra.mxu0 0.0
    %596 = vmatpush.msra.mxu0 0.0
    %597 = vmatpush.msra.mxu0 0.0
    %598 = vmatpush.msra.mxu0 0.0
    %599 = vmatpush.msra.mxu0 0.0
    %600 = vmatpush.msra.mxu0 0.0
    %601 = vmatpush.msra.mxu0 0.0
    %602 = vmatpush.msra.mxu0 %v578
    %603 = vmatpush.msra.mxu0 %v577
    %604 = vmatpush.msra.mxu0 %v576
    %605 = vmatpush.msra.mxu0 %v575
    %606 = vmatmul.f32.gmra.mxu0 %v588
    %v607 = vpop.f32.mrf.mxu0
    %v608 = vadd.f32 %v584, %v607
    %609 = vdwg.mxu0
    %v610 = vmax.f32 %v608, 0.0
    %v611 = vld [vmem:[%s7] sm:$0xff]
    %v612 = vld [vmem:[%s7 + $0x8] sm:$0xff]
    %v613 = vld [vmem:[%s7 + $0x10] sm:$0xff]
    %v614 = vld [vmem:[%s7 + $0x18] sm:$0xff]
    %v615 = vld [vmem:[%s8] sm:$0xff]
    %v616 = vld [vmem:[%s8 + $0x8] sm:$0xff]
    %v617 = vld [vmem:[%s8 + $0x10] sm:$0xff]
    %v618 = vld [vmem:[%s8 + $0x18] sm:$0xff]
    %620 = vset.pattern.permute.xlu0 0
    %621 = vperm.xlu0 %620, %v615
    %v622 = vpop.permute.xlu0 %621
    %625 = vset.pattern.permute.xlu0 0
    %626 = vperm.xlu0 %625, %v616
    %v627 = vpop.permute.xlu0 %626
    %630 = vset.pattern.permute.xlu0 0
    %631 = vperm.xlu0 %630, %v617
    %v632 = vpop.permute.xlu0 %631
    %635 = vset.pattern.permute.xlu0 0
    %636 = vperm.xlu0 %635, %v618
    %v637 = vpop.permute.xlu0 %636
    %v640 = vsel %vm74, %v611, 0
    %v643 = vsel %vm74, %v612, 0
    %v646 = vsel %vm74, %v613, 0
    %v649 = vsel %vm74, %v614, 0
    %vm651 = vcmask 1041408
    %v653 = vsel %vm651, %v610, 0
    %655 = vmatpush.msra.mxu0 0.0
    %656 = vmatpush.msra.mxu0 0.0
    %657 = vmatpush.msra.mxu0 0.0
    %658 = vmatpush.msra.mxu0 0.0
    %659 = vmatpush.msra.mxu0 0.0
    %660 = vmatpush.msra.mxu0 0.0
    %661 = vmatpush.msra.mxu0 0.0
    %662 = vmatpush.msra.mxu0 0.0
    %663 = vmatpush.msra.mxu0 0.0
    %664 = vmatpush.msra.mxu0 0.0
    %665 = vmatpush.msra.mxu0 0.0
    %666 = vmatpush.msra.mxu0 0.0
    %667 = vmatpush.msra.mxu0 0.0
    %668 = vmatpush.msra.mxu0 0.0
    %669 = vmatpush.msra.mxu0 0.0
    %670 = vmatpush.msra.mxu0 %v653
    %671 = vmatmul.f32.gmra.mxu0 %v640
    %v672 = vpop.f32.mrf.mxu0
    %v673 = vadd.f32 %v622, %v672
    %674 = vmatmul.f32.gmra.mxu0 %v643
    %v675 = vpop.f32.mrf.mxu0
    %v676 = vadd.f32 %v627, %v675
    %677 = vmatmul.f32.gmra.mxu0 %v646
    %v678 = vpop.f32.mrf.mxu0
    %v679 = vadd.f32 %v632, %v678
    %680 = vmatmul.f32.gmra.mxu0 %v649
    %v681 = vpop.f32.mrf.mxu0
    %v682 = vadd.f32 %v637, %v681
    %683 = vdwg.mxu0
    %v684 = vxor.u32 %v673, 2147483648
    %v685 = vxor.u32 %v676, 2147483648
    %v686 = vxor.u32 %v679, 2147483648
    %v687 = vxor.u32 %v682, 2147483648
    %v688 = vmul.f32 %v684, 1.442695
    %v689 = vpow.pop %v688
    %v690 = vmul.f32 %v685, 1.442695
    %v691 = vpow.pop %v690
    %v692 = vmul.f32 %v686, 1.442695
    %v693 = vpow.pop %v692
    %v694 = vmul.f32 %v687, 1.442695
    %v695 = vpow.pop %v694
    %v696 = vadd.f32 %v689, 1.0
    %v697 = vadd.f32 %v691, 1.0
    %v698 = vadd.f32 %v693, 1.0
    %v699 = vadd.f32 %v695, 1.0
    %v700 = vrcp.pop %v696
    %v701 = vmul.f32 %v696, %v700
    %v702 = vsub.f32 1.0, %v701
    %v703 = vmul.f32 %v700, %v702
    %v704 = vadd.f32 %v700, %v703
    %vm705 = vweird.f32 %v696
    %vm706 = vweird.f32 %v700
    %vm707 = vmor %vm705, %vm706
    %v708 = vsel %vm707, %v700, %v704
    %v709 = vand.u32 2147483647, %v696
    %vm710 = vcmp.eq.f32.partialorder %v709, 8.507059e+37
    %v711 = vand.u32 %v696, 2147483648
    %v712 = vor.u32 1.1754944e-38, %v711
    %v713 = vsel %vm710, %v712, %v708
    %v714 = vmul.f32 1.0, %v713
    %v715 = vrcp.pop %v697
    %v716 = vmul.f32 %v697, %v715
    %v717 = vsub.f32 1.0, %v716
    %v718 = vmul.f32 %v715, %v717
    %v719 = vadd.f32 %v715, %v718
    %vm720 = vweird.f32 %v697
    %vm721 = vweird.f32 %v715
    %vm722 = vmor %vm720, %vm721
    %v723 = vsel %vm722, %v715, %v719
    %v724 = vand.u32 2147483647, %v697
    %vm725 = vcmp.eq.f32.partialorder %v724, 8.507059e+37
    %v726 = vand.u32 %v697, 2147483648
    %v727 = vor.u32 1.1754944e-38, %v726
    %v728 = vsel %vm725, %v727, %v723
    %v729 = vmul.f32 1.0, %v728
    %v730 = vrcp.pop %v698
    %v731 = vmul.f32 %v698, %v730
    %v732 = vsub.f32 1.0, %v731
    %v733 = vmul.f32 %v730, %v732
    %v734 = vadd.f32 %v730, %v733
    %vm735 = vweird.f32 %v698
    %vm736 = vweird.f32 %v730
    %vm737 = vmor %vm735, %vm736
    %v738 = vsel %vm737, %v730, %v734
    %v739 = vand.u32 2147483647, %v698
    %vm740 = vcmp.eq.f32.partialorder %v739, 8.507059e+37
    %v741 = vand.u32 %v698, 2147483648
    %v742 = vor.u32 1.1754944e-38, %v741
    %v743 = vsel %vm740, %v742, %v738
    %v744 = vmul.f32 1.0, %v743
    %v745 = vrcp.pop %v699
    %v746 = vmul.f32 %v699, %v745
    %v747 = vsub.f32 1.0, %v746
    %v748 = vmul.f32 %v745, %v747
    %v749 = vadd.f32 %v745, %v748
    %vm750 = vweird.f32 %v699
    %vm751 = vweird.f32 %v745
    %vm752 = vmor %vm750, %vm751
    %v753 = vsel %vm752, %v745, %v749
    %v754 = vand.u32 2147483647, %v699
    %vm755 = vcmp.eq.f32.partialorder %v754, 8.507059e+37
    %v756 = vand.u32 %v699, 2147483648
    %v757 = vor.u32 1.1754944e-38, %v756
    %v758 = vsel %vm755, %v757, %v753
    %v759 = vmul.f32 1.0, %v758
    %761 = vset.pattern.permute.xlu0 0
    %762 = vperm.xlu0 %761, %v714
    %v763 = vpop.permute.xlu0 %762
    %766 = vset.pattern.permute.xlu0 0
    %767 = vperm.xlu0 %766, %v729
    %v768 = vpop.permute.xlu0 %767
    %771 = vset.pattern.permute.xlu0 0
    %772 = vperm.xlu0 %771, %v744
    %v773 = vpop.permute.xlu0 %772
    %776 = vset.pattern.permute.xlu0 0
    %777 = vperm.xlu0 %776, %v759
    %v778 = vpop.permute.xlu0 %777
    %v780 = vmul.f32 %v294, %v763
    %v781 = vmul.f32 %v295, %v768
    %v782 = vmul.f32 %v296, %v773
    %v783 = vmul.f32 %v297, %v778
    %v784 = vadd.f32 %v780, %v349
    %v785 = vadd.f32 %v781, %v352
    %v786 = vadd.f32 %v782, %v355
    %v787 = vadd.f32 %v783, %v358
    %v788 = vmax.f32 %v784, 0.0
    %v789 = vmax.f32 %v785, 0.0
    %v790 = vmax.f32 %v786, 0.0
    %v791 = vmax.f32 %v787, 0.0
    %792 = vst [vmem:[#allocation2] sm:$0xff] %v788
    %793 = vst [vmem:[#allocation2 + $0x8] sm:$0xff] %v789
    %794 = vst [vmem:[#allocation2 + $0x10] sm:$0xff] %v790
    %795 = vst [vmem:[#allocation2 + $0x18] sm:$0xff] %v791
    %796 = vset.pattern.permute.xlu0 1
    %797 = vperm.xlu0 %796, %v714
    %v798 = vpop.permute.xlu0 %797
    %800 = vset.pattern.permute.xlu0 1
    %801 = vperm.xlu0 %800, %v729
    %v802 = vpop.permute.xlu0 %801
    %804 = vset.pattern.permute.xlu0 1
    %805 = vperm.xlu0 %804, %v744
    %v806 = vpop.permute.xlu0 %805
    %808 = vset.pattern.permute.xlu0 1
    %809 = vperm.xlu0 %808, %v759
    %v810 = vpop.permute.xlu0 %809
    %v812 = vmul.f32 %v525, %v798
    %v813 = vmul.f32 %v526, %v802
    %v814 = vmul.f32 %v527, %v806
    %v815 = vmul.f32 %v528, %v810
    %v816 = vadd.f32 %v812, %v547
    %v817 = vadd.f32 %v813, %v550
    %v818 = vadd.f32 %v814, %v553
    %v819 = vadd.f32 %v815, %v556
    %v820 = vmax.f32 %v816, 0.0
    %v821 = vmax.f32 %v817, 0.0
    %v822 = vmax.f32 %v818, 0.0
    %v823 = vmax.f32 %v819, 0.0
    %s824 = scalar_lea.vmem [#allocation2], 32
    %825 = vst [vmem:[%s824] sm:$0xff] %v820
    %826 = vst [vmem:[%s824 + $0x8] sm:$0xff] %v821
    %827 = vst [vmem:[%s824 + $0x10] sm:$0xff] %v822
    %828 = vst [vmem:[%s824 + $0x18] sm:$0xff] %v823
    // Predicated region
    $region46: #{tpu_custom_call.1} parent=1 // pred_check
      _
    $region47: #{tpu_custom_call.1} parent=1 // pred_check_branch
      %830 = sbr.rel (0) target = $region49
    $region48: #{tpu_custom_call.1} parent=1 // pred_region
      %832 = vsyncadd [#allocation3], 0
      %s833 = sshll.u32 [#allocation2], 4
      %s834 = int_to_ptr.vmem [resolvable:$true] %s833
      %s835 = sshll.u32 %s11, 4
      %s836 = int_to_ptr.hbm [resolvable:$true] %s835
      %841 = dma.vmem_to_hbm [thread:$0]  %s834, 1024, %s836, [#allocation3], 128, 128, 8
    $region49: #{tpu_custom_call.1} parent=1 // pred_fallthru
      _
    // Predicated region
    $region50: #{tpu_custom_call.1} parent=1 // pred_check
      _
    $region51: #{tpu_custom_call.1} parent=1 // pred_check_branch
      %843 = sbr.rel (0) target = $region53
    $region52: #{tpu_custom_call.1} parent=1 // pred_region
      %845 = dma.done [#allocation3], 1024
    $region53: #{tpu_custom_call.1} parent=1 // pred_fallthru
      _
    %846 = vsyncpa [#allocation3], 1

</llo_original>
